<compile_context>
chip_gen: v5e
topology: v5e:2x2
jax: 0.10.0
libtpu: 0.0.40
codegen_flags: <defaults>
</compile_context>

<pallas_src>
import jax
import jax.numpy as jnp
from jax.experimental import pallas as pl
from jax.experimental.pallas import tpu as pltpu


def _round_up(a, b):
    return (a + b - 1) // b * b


def _mlp_kernel(x_ref, w1_ref, b1_ref, w2_ref, b2_ref, w3_ref, b3_ref, o_ref):
    # x / weights are bf16, matmul accumulation is f32 (preferred_element_type),
    # bias-add + ReLU are done in f32 (no bf16 VPU on v5e).
    x = x_ref[...]
    h = jnp.dot(x, w1_ref[...], preferred_element_type=jnp.float32)
    h = jnp.maximum(h + b1_ref[...], 0.0)
    h = jnp.dot(h.astype(jnp.bfloat16), w2_ref[...],
                preferred_element_type=jnp.float32)
    h = jnp.maximum(h + b2_ref[...], 0.0)
    out = jnp.dot(h.astype(jnp.bfloat16), w3_ref[...],
                  preferred_element_type=jnp.float32)
    out = out + b3_ref[...]
    o_ref[...] = out.astype(o_ref.dtype)


def _pick_tile_m(M, D, out_pad, budget_bytes):
    """Largest row tile that fits the VMEM budget: double-buffered bf16 x tiles
    and f32 out tiles, f32 intermediates, resident bf16 weights counted twice
    as a pessimistic bound for the pipeline's buffering."""
    cap = 512
    if M <= cap:
        # Small input: a single grid step covers everything.
        return _round_up(max(M, 8), 16)
    tile_m = cap
    while tile_m > 16:
        xb = 2 * tile_m * D * 2                       # x tiles, bf16, double-buffered
        ob = 2 * tile_m * out_pad * 4                 # out tiles, f32, double-buffered
        hb = 2 * tile_m * D * 4                       # f32 intermediates (h)
        wb = 2 * (2 * D * D * 2 + D * out_pad * 2)    # bf16 weights (x2 margin)
        bb = 2 * (2 * D * 4 + out_pad * 4)            # f32 biases
        if xb + ob + hb + wb + bb <= budget_bytes:
            return tile_m
        tile_m //= 2
    return 16


@jax.jit
def jigsaw_position_head(x, params):
    """x: (B, N, embed_dim) float32.  params: dict of W1,b1,W2,b2,W3,b3 in
    PyTorch convention (W: (out, in), b: (out,))."""
    B, N, D = x.shape
    out_dim = params["W3"].shape[0]
    M = B * N

    # ---- host-side prep -----------------------------------------------------
    out_pad = _round_up(out_dim, 128)            # lane-dense output stores
    vmem_budget = 24 << 20                       # leave headroom under 32 MiB
    tile_m = _pick_tile_m(M, D, out_pad, vmem_budget)
    M_pad = _round_up(M, tile_m)
    grid_m = M_pad // tile_m
    if grid_m > 1 and grid_m % 2 == 1:           # keep both v7x TCs busy
        grid_m += 1
        M_pad = grid_m * tile_m

    xm = x.reshape(M, D).astype(jnp.bfloat16)
    if M_pad != M:
        xm = jnp.pad(xm, ((0, M_pad - M), (0, 0)))

    w1 = params["W1"].T.astype(jnp.bfloat16)                       # (D, D)
    w2 = params["W2"].T.astype(jnp.bfloat16)                       # (D, D)
    w3 = params["W3"].T.astype(jnp.bfloat16)                       # (D, out_dim)
    if out_pad != out_dim:
        w3 = jnp.pad(w3, ((0, 0), (0, out_pad - out_dim)))
    b1 = params["b1"].reshape(1, -1).astype(jnp.float32)           # (1, D)
    b2 = params["b2"].reshape(1, -1).astype(jnp.float32)           # (1, D)
    b3 = params["b3"].reshape(1, -1).astype(jnp.float32)           # (1, out_dim)
    if out_pad != out_dim:
        b3 = jnp.pad(b3, ((0, 0), (0, out_pad - out_dim)))

    # Weights / biases: constant block index across the grid -> fetched once
    # and kept resident in VMEM by the pipeline.
    full = lambda i: (0, 0)

    out = pl.pallas_call(
        _mlp_kernel,
        out_shape=jax.ShapeDtypeStruct((M_pad, out_pad), jnp.float32),
        grid_spec=pltpu.PrefetchScalarGridSpec(
            num_scalar_prefetch=0,
            grid=(grid_m,),
            in_specs=[
                pl.BlockSpec((tile_m, D), lambda i: (i, 0)),   # x tile (bf16)
                pl.BlockSpec((D, D), full),                    # W1^T (bf16)
                pl.BlockSpec((1, D), full),                    # b1   (f32)
                pl.BlockSpec((D, D), full),                    # W2^T (bf16)
                pl.BlockSpec((1, D), full),                    # b2   (f32)
                pl.BlockSpec((D, out_pad), full),              # W3^T padded (bf16)
                pl.BlockSpec((1, out_pad), full),              # b3   padded (f32)
            ],
            out_specs=pl.BlockSpec((tile_m, out_pad), lambda i: (i, 0)),
        ),
        compiler_params=pltpu.CompilerParams(
            dimension_semantics=("parallel",),
            vmem_limit_bytes=32 << 20,
        ),
    )(xm, w1, b1, w2, b2, w3, b3)

    out = out[:M, :out_dim].reshape(B, N, out_dim)
    # torch's .squeeze(-1): only drops the last axis if it has size 1.
    if out_dim == 1:
        out = out.reshape(B, N)
    return out


def init_params(key, embed_dim, n_jigsaw_patches):
    """Deterministic init mirroring nn.Linear default (uniform +/- 1/sqrt(in))."""
    out_dim = n_jigsaw_patches ** 2
    ks = jax.random.split(key, 6)
    bound = 1.0 / jnp.sqrt(embed_dim)
    return {
        "W1": jax.random.uniform(ks[0], (embed_dim, embed_dim), jnp.float32, -bound, bound),
        "b1": jax.random.uniform(ks[1], (embed_dim,), jnp.float32, -bound, bound),
        "W2": jax.random.uniform(ks[2], (embed_dim, embed_dim), jnp.float32, -bound, bound),
        "b2": jax.random.uniform(ks[3], (embed_dim,), jnp.float32, -bound, bound),
        "W3": jax.random.uniform(ks[4], (out_dim, embed_dim), jnp.float32, -bound, bound),
        "b3": jax.random.uniform(ks[5], (out_dim,), jnp.float32, -bound, bound),
    }


def reference(x, params):
    """Pure-JAX f32 reference of the PyTorch forward."""
    h = jnp.maximum(x @ params["W1"].T + params["b1"], 0.0)
    h = jnp.maximum(h @ params["W2"].T + params["b2"], 0.0)
    out = h @ params["W3"].T + params["b3"]
    return jnp.squeeze(out, -1) if out.shape[-1] == 1 else out


if __name__ == "__main__":
    B, N, EMBED_DIM, N_JIGSAW = 2, 8, 32, 2  # out_dim = 4

    key = jax.random.PRNGKey(0)
    kx, kp = jax.random.split(key)
    x = jax.random.normal(kx, (B, N, EMBED_DIM), jnp.float32)
    params = init_params(kp, EMBED_DIM, N_JIGSAW)

    out = jigsaw_position_head(x, params)
    out = jax.block_until_ready(out)

    ref = reference(x, params)
    assert out.shape == ref.shape, (out.shape, ref.shape)
    # bf16 matmul operands with f32 accumulation: loose tolerance vs f32 ref.
    assert jnp.allclose(out, ref, atol=5e-2, rtol=5e-2), "mismatch vs reference"

    print("KERNEL_OK")
</pallas_src>

<mosaic_0001>
module attributes {stable_mosaic.version = 11 : i64} {
  func.func @_mlp_kernel(%arg0: i32, %arg1: memref<16x32xbf16, #tpu.memory_space<vmem>>, %arg2: memref<32x32xbf16, #tpu.memory_space<vmem>>, %arg3: memref<1x32xf32, #tpu.memory_space<vmem>>, %arg4: memref<32x32xbf16, #tpu.memory_space<vmem>>, %arg5: memref<1x32xf32, #tpu.memory_space<vmem>>, %arg6: memref<32x128xbf16, #tpu.memory_space<vmem>>, %arg7: memref<1x128xf32, #tpu.memory_space<vmem>>, %arg8: memref<16x128xf32, #tpu.memory_space<vmem>>) attributes {dimension_semantics = [#tpu.dimension_semantics<parallel>], iteration_bounds = array<i64: 1>, scalar_prefetch = 0 : i64, scratch_operands = 0 : i64, tpu.core_type = #tpu.core_type<tc>, window_params = [{transform_indices = @transform_0, window_bounds = array<i64: 16, 32>}, {pipeline_mode = #tpu.pipeline_mode<synchronous>, transform_indices = @transform_1, window_bounds = array<i64: 32, 32>}, {pipeline_mode = #tpu.pipeline_mode<synchronous>, transform_indices = @transform_2, window_bounds = array<i64: 1, 32>}, {pipeline_mode = #tpu.pipeline_mode<synchronous>, transform_indices = @transform_3, window_bounds = array<i64: 32, 32>}, {pipeline_mode = #tpu.pipeline_mode<synchronous>, transform_indices = @transform_4, window_bounds = array<i64: 1, 32>}, {pipeline_mode = #tpu.pipeline_mode<synchronous>, transform_indices = @transform_5, window_bounds = array<i64: 32, 128>}, {pipeline_mode = #tpu.pipeline_mode<synchronous>, transform_indices = @transform_6, window_bounds = array<i64: 1, 128>}, {transform_indices = @transform_7, window_bounds = array<i64: 16, 128>}]} {
    %c0 = arith.constant 0 : index
    %c0_0 = arith.constant 0 : index
    %0 = vector.load %arg1[%c0, %c0_0] : memref<16x32xbf16, #tpu.memory_space<vmem>>, vector<16x32xbf16>
    %c0_1 = arith.constant 0 : index
    %c0_2 = arith.constant 0 : index
    %1 = vector.load %arg2[%c0_1, %c0_2] : memref<32x32xbf16, #tpu.memory_space<vmem>>, vector<32x32xbf16>
    %cst = arith.constant dense<0.000000e+00> : vector<16x32xf32>
    %2 = tpu.matmul %0, %1, %cst {dimension_numbers = #tpu.dot_dimension_numbers<[1], [0], [0], [1], [0, 0, 1, 1], [], []>} : vector<16x32xbf16>, vector<32x32xbf16>, vector<16x32xf32> -> vector<16x32xf32>
    %c0_3 = arith.constant 0 : index
    %c0_4 = arith.constant 0 : index
    %3 = vector.load %arg3[%c0_3, %c0_4] : memref<1x32xf32, #tpu.memory_space<vmem>>, vector<1x32xf32>
    %4 = vector.broadcast %3 : vector<1x32xf32> to vector<16x32xf32>
    %5 = arith.addf %2, %4 : vector<16x32xf32>
    %cst_5 = arith.constant 0.000000e+00 : f32
    %6 = vector.broadcast %cst_5 : f32 to vector<16x32xf32>
    %7 = arith.maximumf %5, %6 : vector<16x32xf32>
    %8 = arith.truncf %7 : vector<16x32xf32> to vector<16x32xbf16>
    %c0_6 = arith.constant 0 : index
    %c0_7 = arith.constant 0 : index
    %9 = vector.load %arg4[%c0_6, %c0_7] : memref<32x32xbf16, #tpu.memory_space<vmem>>, vector<32x32xbf16>
    %cst_8 = arith.constant dense<0.000000e+00> : vector<16x32xf32>
    %10 = tpu.matmul %8, %9, %cst_8 {dimension_numbers = #tpu.dot_dimension_numbers<[1], [0], [0], [1], [0, 0, 1, 1], [], []>} : vector<16x32xbf16>, vector<32x32xbf16>, vector<16x32xf32> -> vector<16x32xf32>
    %c0_9 = arith.constant 0 : index
    %c0_10 = arith.constant 0 : index
    %11 = vector.load %arg5[%c0_9, %c0_10] : memref<1x32xf32, #tpu.memory_space<vmem>>, vector<1x32xf32>
    %12 = vector.broadcast %11 : vector<1x32xf32> to vector<16x32xf32>
    %13 = arith.addf %10, %12 : vector<16x32xf32>
    %cst_11 = arith.constant 0.000000e+00 : f32
    %14 = vector.broadcast %cst_11 : f32 to vector<16x32xf32>
    %15 = arith.maximumf %13, %14 : vector<16x32xf32>
    %16 = arith.truncf %15 : vector<16x32xf32> to vector<16x32xbf16>
    %c0_12 = arith.constant 0 : index
    %c0_13 = arith.constant 0 : index
    %17 = vector.load %arg6[%c0_12, %c0_13] : memref<32x128xbf16, #tpu.memory_space<vmem>>, vector<32x128xbf16>
    %cst_14 = arith.constant dense<0.000000e+00> : vector<16x128xf32>
    %18 = tpu.matmul %16, %17, %cst_14 {dimension_numbers = #tpu.dot_dimension_numbers<[1], [0], [0], [1], [0, 0, 1, 1], [], []>} : vector<16x32xbf16>, vector<32x128xbf16>, vector<16x128xf32> -> vector<16x128xf32>
    %c0_15 = arith.constant 0 : index
    %c0_16 = arith.constant 0 : index
    %19 = vector.load %arg7[%c0_15, %c0_16] : memref<1x128xf32, #tpu.memory_space<vmem>>, vector<1x128xf32>
    %20 = vector.broadcast %19 : vector<1x128xf32> to vector<16x128xf32>
    %21 = arith.addf %18, %20 : vector<16x128xf32>
    %c0_17 = arith.constant 0 : index
    %c0_18 = arith.constant 0 : index
    %22 = vector.load %arg8[%c0_17, %c0_18] : memref<16x128xf32, #tpu.memory_space<vmem>>, vector<16x128xf32>
    tpu.vector_store %arg8[%c0_17, %c0_18], %21 {strides = array<i32>} : memref<16x128xf32, #tpu.memory_space<vmem>>, vector<16x128xf32>,
    return
  }
  func.func @transform_0(%arg0: i32) -> (i32, i32) {
    %c0_i32 = arith.constant 0 : i32
    %c0_i32_0 = arith.constant 0 : i32
    return %arg0, %c0_i32 : i32, i32
  }
  func.func @transform_1(%arg0: i32) -> (i32, i32) {
    %c0_i32 = arith.constant 0 : i32
    %c0_i32_0 = arith.constant 0 : i32
    %c0_i32_1 = arith.constant 0 : i32
    return %c0_i32, %c0_i32_0 : i32, i32
  }
  func.func @transform_2(%arg0: i32) -> (i32, i32) {
    %c0_i32 = arith.constant 0 : i32
    %c0_i32_0 = arith.constant 0 : i32
    %c0_i32_1 = arith.constant 0 : i32
    return %c0_i32, %c0_i32_0 : i32, i32
  }
  func.func @transform_3(%arg0: i32) -> (i32, i32) {
    %c0_i32 = arith.constant 0 : i32
    %c0_i32_0 = arith.constant 0 : i32
    %c0_i32_1 = arith.constant 0 : i32
    return %c0_i32, %c0_i32_0 : i32, i32
  }
  func.func @transform_4(%arg0: i32) -> (i32, i32) {
    %c0_i32 = arith.constant 0 : i32
    %c0_i32_0 = arith.constant 0 : i32
    %c0_i32_1 = arith.constant 0 : i32
    return %c0_i32, %c0_i32_0 : i32, i32
  }
  func.func @transform_5(%arg0: i32) -> (i32, i32) {
    %c0_i32 = arith.constant 0 : i32
    %c0_i32_0 = arith.constant 0 : i32
    %c0_i32_1 = arith.constant 0 : i32
    return %c0_i32, %c0_i32_0 : i32, i32
  }
  func.func @transform_6(%arg0: i32) -> (i32, i32) {
    %c0_i32 = arith.constant 0 : i32
    %c0_i32_0 = arith.constant 0 : i32
    %c0_i32_1 = arith.constant 0 : i32
    return %c0_i32, %c0_i32_0 : i32, i32
  }
  func.func @transform_7(%arg0: i32) -> (i32, i32) {
    %c0_i32 = arith.constant 0 : i32
    %c0_i32_0 = arith.constant 0 : i32
    return %arg0, %c0_i32 : i32, i32
  }
}

</mosaic_0001>

<llo_original>
// kernel: jigsaw_position_head.1
$region0: #{jigsaw_position_head.1}
  #allocation0 [shape = 'u32[]', space=smem, size = 0x4, offset = 0x4, fixed_abs, tag = 'smem constant byte address 0x4 - core index']
  #allocation1 [shape = 'u32[72,128]{1,0:T(1,128)}', space=vmem, size = 0x9000, scoped, tag = 'internal scratch']
  %s0 = inlined_call_operand.vmem [shape: bf16[16,32], index: 0, kind: input, shape index: {}]
  %s1 = inlined_call_operand.vmem [shape: bf16[32,32], index: 1, kind: input, shape index: {}]
  %s2 = inlined_call_operand.vmem [shape: f32[1,32], index: 2, kind: input, shape index: {}]
  %s3 = inlined_call_operand.vmem [shape: bf16[32,32], index: 3, kind: input, shape index: {}]
  %s4 = inlined_call_operand.vmem [shape: f32[1,32], index: 4, kind: input, shape index: {}]
  %s5 = inlined_call_operand.vmem [shape: bf16[32,128], index: 5, kind: input, shape index: {}]
  %s6 = inlined_call_operand.vmem [shape: f32[1,128], index: 6, kind: input, shape index: {}]
  %s7 = inlined_call_operand.vmem [shape: f32[16,128], index: 7, kind: output, shape index: {}]
  %s8 = sld [smem:[#allocation0]]
  $region38: #{jigsaw_position_head.1} parent=0
    _
  %s10 = ssub.s32 1, %s8
  %s11 = scalar_select 0, %s10, %s8
  // Predicated region
  $region2: #{jigsaw_position_head.1} parent=0 // pred_check
    _
  $region3: #{jigsaw_position_head.1} parent=0 // pred_check_branch
    %13 = sbr.rel (0) target = $region5
  $region4: #{jigsaw_position_head.1} parent=0 // pred_region
    _
  $region5: #{jigsaw_position_head.1} parent=0 // pred_fallthru
    _
  // Predicated region
  $region6: #{jigsaw_position_head.1} parent=0 // pred_check
    _
  $region7: #{jigsaw_position_head.1} parent=0 // pred_check_branch
    %15 = sbr.rel (0) target = $region9
  $region8: #{jigsaw_position_head.1} parent=0 // pred_region
    _
  $region9: #{jigsaw_position_head.1} parent=0 // pred_fallthru
    _
  // Predicated region
  $region10: #{jigsaw_position_head.1} parent=0 // pred_check
    _
  $region11: #{jigsaw_position_head.1} parent=0 // pred_check_branch
    %17 = sbr.rel (0) target = $region13
  $region12: #{jigsaw_position_head.1} parent=0 // pred_region
    _
  $region13: #{jigsaw_position_head.1} parent=0 // pred_fallthru
    _
  // Predicated region
  $region14: #{jigsaw_position_head.1} parent=0 // pred_check
    _
  $region15: #{jigsaw_position_head.1} parent=0 // pred_check_branch
    %19 = sbr.rel (0) target = $region17
  $region16: #{jigsaw_position_head.1} parent=0 // pred_region
    _
  $region17: #{jigsaw_position_head.1} parent=0 // pred_fallthru
    _
  // Predicated region
  $region18: #{jigsaw_position_head.1} parent=0 // pred_check
    _
  $region19: #{jigsaw_position_head.1} parent=0 // pred_check_branch
    %21 = sbr.rel (0) target = $region21
  $region20: #{jigsaw_position_head.1} parent=0 // pred_region
    _
  $region21: #{jigsaw_position_head.1} parent=0 // pred_fallthru
    _
  // Predicated region
  $region22: #{jigsaw_position_head.1} parent=0 // pred_check
    _
  $region23: #{jigsaw_position_head.1} parent=0 // pred_check_branch
    %23 = sbr.rel (0) target = $region25
  $region24: #{jigsaw_position_head.1} parent=0 // pred_region
    _
  $region25: #{jigsaw_position_head.1} parent=0 // pred_fallthru
    _
  // Predicated region
  $region26: #{jigsaw_position_head.1} parent=0 // pred_check
    _
  $region27: #{jigsaw_position_head.1} parent=0 // pred_check_branch
    %25 = sbr.rel (0) target = $region29
  $region28: #{jigsaw_position_head.1} parent=0 // pred_region
    _
  $region29: #{jigsaw_position_head.1} parent=0 // pred_fallthru
    _
  %v27 = vld [vmem:[%s0] sm:$0xf]
  %v28 = vld [vmem:[%s0 + $0x4] sm:$0xf]
  %v29 = vld [vmem:[%s1] sm:$0xf]
  %v30 = vld [vmem:[%s1 + $0x4] sm:$0xf]
  %v31 = vld [vmem:[%s1 + $0x8] sm:$0xf]
  %v32 = vld [vmem:[%s1 + $0xc] sm:$0xf]
  %v33 = vld [vmem:[%s2] sm:$0x1]
  %v35 = vperm.slane %v33, 0
  %v39 = vunpack.c.l.b16 %v27
  %v40 = vunpack.c.l.b16 %v28
  %v41 = vpack.c.b16 %v40, %v39
  %v46 = vunpack.c.l.b16 %v29
  %v47 = vunpack.c.l.b16 %v30
  %v48 = vunpack.c.l.b16 %v31
  %v49 = vunpack.c.l.b16 %v32
  %v50 = vpack.c.b16 %v47, %v46
  %v51 = vpack.c.b16 %v49, %v48
  %vm54 = vcmask 261120
  %v56 = vsel %vm54, %v41, 0
  %58 = vmatpush.bf16.msra.mxu0 0
  %59 = vmatpush.bf16.msra.mxu0 0
  %60 = vmatpush.bf16.msra.mxu0 0
  %61 = vmatpush.bf16.msra.mxu0 0
  %62 = vmatpush.bf16.msra.mxu0 0
  %63 = vmatpush.bf16.msra.mxu0 0
  %64 = vmatpush.bf16.msra.mxu0 %v51
  %65 = vmatpush.bf16.msra.mxu0 %v50
  %66 = vmatmul.bf16.gmra.mxu0 %v56
  %v67 = vpop.f32.mrf.mxu0
  %v68 = vadd.f32 %v35, %v67
  %v69 = vpop.f32.mrf.mxu0
  %v70 = vadd.f32 %v35, %v69
  %71 = vdwg.mxu0
  %v72 = vmax.f32 %v68, 0.0
  %v73 = vmax.f32 %v70, 0.0
  %v74 = vpack.c.bf16 %v73, %v72
  %v75 = vld [vmem:[%s3] sm:$0xf]
  %v76 = vld [vmem:[%s3 + $0x4] sm:$0xf]
  %v77 = vld [vmem:[%s3 + $0x8] sm:$0xf]
  %v78 = vld [vmem:[%s3 + $0xc] sm:$0xf]
  %v79 = vld [vmem:[%s4] sm:$0x1]
  %v81 = vperm.slane %v79, 0
  %v87 = vunpack.c.l.b16 %v75
  %v88 = vunpack.c.l.b16 %v76
  %v89 = vunpack.c.l.b16 %v77
  %v90 = vunpack.c.l.b16 %v78
  %v91 = vpack.c.b16 %v88, %v87
  %v92 = vpack.c.b16 %v90, %v89
  %v96 = vsel %vm54, %v74, 0
  %98 = vmatpush.bf16.msra.mxu0 0
  %99 = vmatpush.bf16.msra.mxu0 0
  %100 = vmatpush.bf16.msra.mxu0 0
  %101 = vmatpush.bf16.msra.mxu0 0
  %102 = vmatpush.bf16.msra.mxu0 0
  %103 = vmatpush.bf16.msra.mxu0 0
  %104 = vmatpush.bf16.msra.mxu0 %v92
  %105 = vmatpush.bf16.msra.mxu0 %v91
  %106 = vmatmul.bf16.gmra.mxu0 %v96
  %v107 = vpop.f32.mrf.mxu0
  %v108 = vadd.f32 %v81, %v107
  %v109 = vpop.f32.mrf.mxu0
  %v110 = vadd.f32 %v81, %v109
  %111 = vdwg.mxu0
  %v112 = vmax.f32 %v108, 0.0
  %v113 = vmax.f32 %v110, 0.0
  %v114 = vpack.c.bf16 %v113, %v112
  %v115 = vld [vmem:[%s5] sm:$0xf]
  %v116 = vld [vmem:[%s5 + $0x4] sm:$0xf]
  %v117 = vld [vmem:[%s5 + $0x8] sm:$0xf]
  %v118 = vld [vmem:[%s5 + $0xc] sm:$0xf]
  %v119 = vld [vmem:[%s6] sm:$0x1]
  %v121 = vperm.slane %v119, 0
  %v127 = vunpack.c.l.b16 %v115
  %v128 = vunpack.c.l.b16 %v116
  %v129 = vunpack.c.l.b16 %v117
  %v130 = vunpack.c.l.b16 %v118
  %v131 = vpack.c.b16 %v128, %v127
  %v132 = vpack.c.b16 %v130, %v129
  %v136 = vsel %vm54, %v114, 0
  %138 = vmatpush.bf16.msra.mxu0 0
  %139 = vmatpush.bf16.msra.mxu0 0
  %140 = vmatpush.bf16.msra.mxu0 0
  %141 = vmatpush.bf16.msra.mxu0 0
  %142 = vmatpush.bf16.msra.mxu0 0
  %143 = vmatpush.bf16.msra.mxu0 0
  %144 = vmatpush.bf16.msra.mxu0 %v132
  %145 = vmatpush.bf16.msra.mxu0 %v131
  %146 = vmatmul.bf16.gmra.mxu0 %v136
  %v147 = vpop.f32.mrf.mxu0
  %v148 = vadd.f32 %v121, %v147
  %v149 = vpop.f32.mrf.mxu0
  %v150 = vadd.f32 %v121, %v149
  %151 = vdwg.mxu0
  %152 = vst [vmem:[%s7] sm:$0xff] %v148
  %153 = vst [vmem:[%s7 + $0x8] sm:$0xff] %v150
  // Predicated region
  $region30: #{jigsaw_position_head.1} parent=0 // pred_check
    _
  $region31: #{jigsaw_position_head.1} parent=0 // pred_check_branch
    %155 = sbr.rel (0) target = $region33
  $region32: #{jigsaw_position_head.1} parent=0 // pred_region
    _
  $region33: #{jigsaw_position_head.1} parent=0 // pred_fallthru
    _
  // Predicated region
  $region34: #{jigsaw_position_head.1} parent=0 // pred_check
    _
  $region35: #{jigsaw_position_head.1} parent=0 // pred_check_branch
    %157 = sbr.rel (0) target = $region37
  $region36: #{jigsaw_position_head.1} parent=0 // pred_region
    _
  $region37: #{jigsaw_position_head.1} parent=0 // pred_fallthru
    _

</llo_original>
